<compile_context>
chip_gen: v7x
topology: tpu7x:2x2x1
jax: 0.10.0
libtpu: 0.0.40
codegen_flags: <defaults>
</compile_context>

<pallas_src>
import functools

import jax
import jax.numpy as jnp
from jax.experimental import pallas as pl
from jax.experimental.pallas import tpu as pltpu

LN_EPS = 1e-5


def _round_up(x, m):
    return ((x + m - 1) // m) * m


def _sublane(dtype):
    itemsize = jnp.dtype(dtype).itemsize
    if itemsize >= 4:
        return 8
    if itemsize == 2:
        return 16
    return 32


def _vmem_capacity_bytes():
    try:
        return int(pltpu.get_tpu_info().vmem_capacity_bytes)
    except Exception:
        return 128 << 20


def _const_spec(block_shape, index_map):
    """BlockSpec for a block whose index never changes: single-buffer it."""
    if hasattr(pl, "Buffered"):
        try:
            return pl.BlockSpec(block_shape, index_map,
                                pipeline_mode=pl.Buffered(1))
        except TypeError:
            pass
    return pl.BlockSpec(block_shape, index_map)


def prepare_params(w1, b1, w2, b2, gamma, beta):
    """Pad / reshape MLPBlock parameters once, outside the per-call hot path."""
    D, H = w1.shape
    assert w2.shape == (H, D), "residual add requires out_dim == in_dim"
    Dp = _round_up(D, 128)
    Hp = _round_up(H, 128)

    if (D, H) == (Dp, Hp):
        w1p, w2p = w1, w2
    else:
        w1p = jnp.zeros((Dp, Hp), w1.dtype).at[:D, :H].set(w1)
        w2p = jnp.zeros((Hp, Dp), w2.dtype).at[:H, :D].set(w2)
    b1p = jnp.zeros((1, Hp), jnp.float32).at[0, :H].set(b1.astype(jnp.float32))
    # Fused (b2, gamma, beta) constants in one small resident block.
    cgb = jnp.zeros((3, Dp), jnp.float32)
    cgb = cgb.at[0, :D].set(b2.astype(jnp.float32))
    cgb = cgb.at[1, :D].set(gamma.astype(jnp.float32))
    cgb = cgb.at[2, :D].set(beta.astype(jnp.float32))
    return {"w1": w1p, "b1": b1p, "w2": w2p, "cgb": cgb, "d": D, "h": H}


def mlp_block_kernel(x_ref, w1_ref, b1_ref, w2_ref, cgb_ref, o_ref, acc_ref,
                     *, d_true, compute_dtype):
    h_idx = pl.program_id(1)

    @pl.when(h_idx == 0)
    def _():
        acc_ref[...] = jnp.zeros_like(acc_ref)

    x = x_ref[...]                                           # (tm, Dp), input dtype

    # in_linear (this H block) + ReLU: MXU matmul, f32 accumulation.
    hblk = jnp.dot(x.astype(compute_dtype), w1_ref[...].astype(compute_dtype),
                   preferred_element_type=jnp.float32)
    hblk = jnp.maximum(hblk + b1_ref[...], 0.0)
    # TODO(synk): dropout omitted (identity in eval mode; no RNG masking).

    # out_linear partial product for this H block, accumulated in f32 scratch.
    acc_ref[...] += jnp.dot(hblk.astype(compute_dtype),
                            w2_ref[...].astype(compute_dtype),
                            preferred_element_type=jnp.float32)

    @pl.when(h_idx == pl.num_programs(1) - 1)
    def _():
        # residual + LayerNorm.  Padded lanes of z are exactly zero (x, w2
        # columns, b2 are zero-padded), so sum / sum-of-squares divided by the
        # true D gives exact statistics without any mask.
        z = acc_ref[...] + cgb_ref[0:1, :] + x.astype(jnp.float32)
        inv_d = 1.0 / float(d_true)
        mean = jnp.sum(z, axis=-1, keepdims=True) * inv_d
        var = jnp.sum(z * z, axis=-1, keepdims=True) * inv_d - mean * mean
        var = jnp.maximum(var, 0.0)
        norm = (z - mean) * jax.lax.rsqrt(var + LN_EPS)
        out = norm * cgb_ref[1:2, :] + cgb_ref[2:3, :]
        o_ref[...] = out.astype(o_ref.dtype)


def mlp_block(x, params, *, tm=None, th=None, use_bf16_matmul=False):
    """Fused MLPBlock forward (eval mode).  x: [B, *, D]; params from prepare_params."""
    orig_shape = x.shape
    D, H = params["d"], params["h"]
    assert orig_shape[-1] == D
    w1p, b1p, w2p, cgb = params["w1"], params["b1"], params["w2"], params["cgb"]
    Dp, Hp = w1p.shape
    dt = x.dtype
    compute_dtype = jnp.bfloat16 if (use_bf16_matmul and dt == jnp.float32) else dt

    N = 1
    for s in orig_shape[:-1]:
        N *= s
    x2 = x.reshape(N, D)

    vmem_cap = _vmem_capacity_bytes()
    sub = _sublane(dt)

    # Row tile: 512 on 128-MiB-VMEM parts (v5e/v6e), 256 on v7x; clamp to N.
    if tm is None:
        tm = 512 if vmem_cap > (96 << 20) else 256
    tm_eff = min(tm, _round_up(N, sub))
    # Keep >= 2 row steps when possible so the "parallel" row axis can shard
    # across both TensorCores on v7x.
    if tm_eff >= N and N > sub:
        tm_eff = _round_up((N + 1) // 2, sub)
    Np = _round_up(N, tm_eff)

    # Hidden-dim tile: keep full H resident if the weight blocks fit a fraction
    # of VMEM; otherwise block over H (128-lane-aligned) and accumulate.
    wsz = jnp.dtype(w1p.dtype).itemsize
    if th is None:
        th = Hp
        budget = vmem_cap // 3
        while (th > 128 and (2 * 2 * Dp * th * wsz) > budget
               and th % 2 == 0 and (th // 2) % 128 == 0 and Hp % (th // 2) == 0):
            th //= 2
    assert Hp % th == 0 and th % 128 == 0
    n_hblk = Hp // th

    # Pad input rows / features only when needed (aligned fast path).
    aligned = (N == Np and D == Dp)
    if aligned:
        xp = x2
    else:
        xp = jnp.zeros((Np, Dp), dt).at[:N, :D].set(x2)

    isz = jnp.dtype(dt).itemsize
    weight_bufs = 2 if n_hblk > 1 else 1            # single-buffered when constant
    vmem_est = (2 * 2 * tm_eff * Dp * isz                     # x + out, double-buffered
                + weight_bufs * (Dp * th + th * Dp) * wsz     # w1 + w2 blocks
                + (Hp + 3 * Dp) * 4                           # b1 + fused constants
                + tm_eff * Dp * 4                             # f32 accumulator scratch
                + (tm_eff * th + 2 * tm_eff * Dp) * 4)        # f32 intermediates
    cap = (48 << 20) if vmem_cap <= (64 << 20) else min(100 << 20,
                                                        vmem_cap - (16 << 20))
    vmem_limit = int(min(max(32 << 20, 2 * vmem_est), cap))

    flops = 2 * 2 * Np * Dp * Hp
    bytes_accessed = int(2 * Np * Dp * isz + (Dp * Hp + Hp * Dp) * wsz
                         + (Hp + 3 * Dp) * 4)
    cost = pl.CostEstimate(flops=int(flops), transcendentals=int(Np),
                           bytes_accessed=bytes_accessed)

    if n_hblk == 1:
        w1_spec = _const_spec((Dp, th), lambda i, h: (0, 0))
        b1_spec = _const_spec((1, th), lambda i, h: (0, 0))
        w2_spec = _const_spec((th, Dp), lambda i, h: (0, 0))
    else:
        w1_spec = pl.BlockSpec((Dp, th), lambda i, h: (0, h))
        b1_spec = pl.BlockSpec((1, th), lambda i, h: (0, h))
        w2_spec = pl.BlockSpec((th, Dp), lambda i, h: (h, 0))
    cgb_spec = _const_spec((3, Dp), lambda i, h: (0, 0))

    out = pl.pallas_call(
        functools.partial(mlp_block_kernel, d_true=D, compute_dtype=compute_dtype),
        out_shape=jax.ShapeDtypeStruct((Np, Dp), dt),
        grid_spec=pltpu.PrefetchScalarGridSpec(
            num_scalar_prefetch=0,
            grid=(Np // tm_eff, n_hblk),
            in_specs=[
                pl.BlockSpec((tm_eff, Dp), lambda i, h: (i, 0)),   # x rows
                w1_spec, b1_spec, w2_spec, cgb_spec,
            ],
            out_specs=pl.BlockSpec((tm_eff, Dp), lambda i, h: (i, 0)),
            scratch_shapes=[pltpu.VMEM((tm_eff, Dp), jnp.float32)],
        ),
        compiler_params=pltpu.CompilerParams(
            dimension_semantics=("parallel", "arbitrary"),
            vmem_limit_bytes=vmem_limit,
        ),
        cost_estimate=cost,
    )(xp, w1p, b1p, w2p, cgb)

    if aligned:
        return out.reshape(orig_shape)
    return out[:N, :D].reshape(orig_shape[:-1] + (D,))


def reference(x, w1, b1, w2, b2, gamma, beta):
    h = jnp.maximum(x @ w1 + b1, 0.0)
    y = h @ w2 + b2
    z = y + x
    mean = jnp.mean(z, axis=-1, keepdims=True)
    var = jnp.mean((z - mean) ** 2, axis=-1, keepdims=True)
    return (z - mean) * jax.lax.rsqrt(var + LN_EPS) * gamma + beta


if __name__ == "__main__":
    B, S = 2, 8            # N = 16 rows
    in_dim = out_dim = 32
    hidden_dim = 64

    key = jax.random.PRNGKey(0)
    kx, k1, k2, k3, k4 = jax.random.split(key, 5)

    x = jax.random.normal(kx, (B, S, in_dim), dtype=jnp.float32)
    w1 = jax.random.uniform(k1, (in_dim, hidden_dim), minval=-1.0, maxval=1.0) / jnp.sqrt(1.0 * in_dim)
    b1 = jax.random.uniform(k2, (hidden_dim,), minval=-1.0, maxval=1.0) / jnp.sqrt(1.0 * in_dim)
    w2 = jax.random.uniform(k3, (hidden_dim, out_dim), minval=-1.0, maxval=1.0) / jnp.sqrt(1.0 * hidden_dim)
    b2 = jax.random.uniform(k4, (out_dim,), minval=-1.0, maxval=1.0) / jnp.sqrt(1.0 * hidden_dim)
    gamma = jnp.ones((out_dim,), dtype=jnp.float32)
    beta = jnp.zeros((out_dim,), dtype=jnp.float32)

    params = prepare_params(w1, b1, w2, b2, gamma, beta)

    out = jax.block_until_ready(mlp_block(x, params))
    ref = reference(x, w1, b1, w2, b2, gamma, beta)
    assert out.shape == (B, S, out_dim)
    assert jnp.allclose(out, ref, atol=1e-4, rtol=1e-4)

    # Ragged row count (N = 14, not a multiple of the row tile) -> row padding.
    x_r = jax.random.normal(kx, (2, 7, in_dim), dtype=jnp.float32)
    out_r = jax.block_until_ready(mlp_block(x_r, params))
    ref_r = reference(x_r, w1, b1, w2, b2, gamma, beta)
    assert out_r.shape == (2, 7, out_dim)
    assert jnp.allclose(out_r, ref_r, atol=1e-4, rtol=1e-4)

    # Multi-block hidden dim exercises the H-axis accumulator path (th=128 < Hp=256).
    hidden_dim2 = 256
    w1b = jax.random.uniform(k1, (in_dim, hidden_dim2), minval=-1.0, maxval=1.0) / jnp.sqrt(1.0 * in_dim)
    b1b = jax.random.uniform(k2, (hidden_dim2,), minval=-1.0, maxval=1.0) / jnp.sqrt(1.0 * in_dim)
    w2b = jax.random.uniform(k3, (hidden_dim2, out_dim), minval=-1.0, maxval=1.0) / jnp.sqrt(1.0 * hidden_dim2)
    params_b = prepare_params(w1b, b1b, w2b, b2, gamma, beta)
    out_b = jax.block_until_ready(mlp_block(x, params_b, th=128))
    ref_b = reference(x, w1b, b1b, w2b, b2, gamma, beta)
    assert jnp.allclose(out_b, ref_b, atol=1e-4, rtol=1e-4)

    print("KERNEL_OK")
</pallas_src>

<mosaic_0001>
module attributes {stable_mosaic.version = 11 : i64} {
  func.func @mlp_block_kernel(%arg0: i32, %arg1: i32, %arg2: memref<8x128xf32, #tpu.memory_space<vmem>>, %arg3: memref<128x128xf32, #tpu.memory_space<vmem>>, %arg4: memref<1x128xf32, #tpu.memory_space<vmem>>, %arg5: memref<128x128xf32, #tpu.memory_space<vmem>>, %arg6: memref<3x128xf32, #tpu.memory_space<vmem>>, %arg7: memref<8x128xf32, #tpu.memory_space<vmem>>, %arg8: memref<8x128xf32, #tpu.memory_space<vmem>>) attributes {dimension_semantics = [#tpu.dimension_semantics<parallel>, #tpu.dimension_semantics<arbitrary>], iteration_bounds = array<i64: 2, 1>, scalar_prefetch = 0 : i64, scratch_operands = 1 : i64, tpu.core_type = #tpu.core_type<tc>, window_params = [{transform_indices = @transform_0, window_bounds = array<i64: 8, 128>}, {pipeline_mode = #tpu.pipeline_mode<synchronous>, transform_indices = @transform_1, window_bounds = array<i64: 128, 128>}, {pipeline_mode = #tpu.pipeline_mode<synchronous>, transform_indices = @transform_2, window_bounds = array<i64: 1, 128>}, {pipeline_mode = #tpu.pipeline_mode<synchronous>, transform_indices = @transform_3, window_bounds = array<i64: 128, 128>}, {pipeline_mode = #tpu.pipeline_mode<synchronous>, transform_indices = @transform_4, window_bounds = array<i64: 3, 128>}, {transform_indices = @transform_5, window_bounds = array<i64: 8, 128>}]} {
    %c0_i32 = arith.constant 0 : i32
    %0 = arith.cmpi eq, %arg1, %c0_i32 : i32
    %1 = arith.extui %0 : i1 to i32
    %c0_i32_0 = arith.constant 0 : i32
    %2 = arith.cmpi ne, %1, %c0_i32_0 : i32
    scf.if %2 {
      %cst_16 = arith.constant 0.000000e+00 : f32
      %19 = vector.broadcast %cst_16 : f32 to vector<8x128xf32>
      %c0_17 = arith.constant 0 : index
      %c0_18 = arith.constant 0 : index
      %20 = vector.load %arg8[%c0_17, %c0_18] : memref<8x128xf32, #tpu.memory_space<vmem>>, vector<8x128xf32>
      tpu.vector_store %arg8[%c0_17, %c0_18], %19 {strides = array<i32>} : memref<8x128xf32, #tpu.memory_space<vmem>>, vector<8x128xf32>,
    } else {
    }
    %c0 = arith.constant 0 : index
    %c0_1 = arith.constant 0 : index
    %3 = vector.load %arg2[%c0, %c0_1] : memref<8x128xf32, #tpu.memory_space<vmem>>, vector<8x128xf32>
    %c0_2 = arith.constant 0 : index
    %c0_3 = arith.constant 0 : index
    %4 = vector.load %arg3[%c0_2, %c0_3] : memref<128x128xf32, #tpu.memory_space<vmem>>, vector<128x128xf32>
    %cst = arith.constant dense<0.000000e+00> : vector<8x128xf32>
    %5 = tpu.matmul %3, %4, %cst {dimension_numbers = #tpu.dot_dimension_numbers<[1], [0], [0], [1], [0, 0, 1, 1], [], []>} : vector<8x128xf32>, vector<128x128xf32>, vector<8x128xf32> -> vector<8x128xf32>
    %c0_4 = arith.constant 0 : index
    %c0_5 = arith.constant 0 : index
    %6 = vector.load %arg4[%c0_4, %c0_5] : memref<1x128xf32, #tpu.memory_space<vmem>>, vector<1x128xf32>
    %7 = vector.broadcast %6 : vector<1x128xf32> to vector<8x128xf32>
    %8 = arith.addf %5, %7 : vector<8x128xf32>
    %cst_6 = arith.constant 0.000000e+00 : f32
    %9 = vector.broadcast %cst_6 : f32 to vector<8x128xf32>
    %10 = arith.maximumf %8, %9 : vector<8x128xf32>
    %c0_7 = arith.constant 0 : index
    %c0_8 = arith.constant 0 : index
    %11 = vector.load %arg8[%c0_7, %c0_8] : memref<8x128xf32, #tpu.memory_space<vmem>>, vector<8x128xf32>
    %c0_9 = arith.constant 0 : index
    %c0_10 = arith.constant 0 : index
    %12 = vector.load %arg5[%c0_9, %c0_10] : memref<128x128xf32, #tpu.memory_space<vmem>>, vector<128x128xf32>
    %cst_11 = arith.constant dense<0.000000e+00> : vector<8x128xf32>
    %13 = tpu.matmul %10, %12, %cst_11 {dimension_numbers = #tpu.dot_dimension_numbers<[1], [0], [0], [1], [0, 0, 1, 1], [], []>} : vector<8x128xf32>, vector<128x128xf32>, vector<8x128xf32> -> vector<8x128xf32>
    %14 = arith.addf %11, %13 : vector<8x128xf32>
    %c0_12 = arith.constant 0 : index
    %c0_13 = arith.constant 0 : index
    %15 = vector.load %arg8[%c0_12, %c0_13] : memref<8x128xf32, #tpu.memory_space<vmem>>, vector<8x128xf32>
    tpu.vector_store %arg8[%c0_12, %c0_13], %14 {strides = array<i32>} : memref<8x128xf32, #tpu.memory_space<vmem>>, vector<8x128xf32>,
    %c0_i32_14 = arith.constant 0 : i32
    %16 = arith.cmpi eq, %arg1, %c0_i32_14 : i32
    %17 = arith.extui %16 : i1 to i32
    %c0_i32_15 = arith.constant 0 : i32
    %18 = arith.cmpi ne, %17, %c0_i32_15 : i32
    scf.if %18 {
      %c0_16 = arith.constant 0 : index
      %c0_17 = arith.constant 0 : index
      %19 = vector.load %arg8[%c0_16, %c0_17] : memref<8x128xf32, #tpu.memory_space<vmem>>, vector<8x128xf32>
      %c0_18 = arith.constant 0 : index
      %c0_19 = arith.constant 0 : index
      %20 = vector.load %arg6[%c0_18, %c0_19] : memref<3x128xf32, #tpu.memory_space<vmem>>, vector<1x128xf32>
      %21 = vector.broadcast %20 : vector<1x128xf32> to vector<8x128xf32>
      %22 = arith.addf %19, %21 : vector<8x128xf32>
      %23 = arith.addf %22, %3 : vector<8x128xf32>
      %cst_20 = arith.constant dense<0.000000e+00> : vector<8xf32>
      %24 = vector.multi_reduction <add>, %23, %cst_20 [1] : vector<8x128xf32> to vector<8xf32>
      %25 = vector.shape_cast %24 : vector<8xf32> to vector<8x1xf32>
      %cst_21 = arith.constant 3.125000e-02 : f32
      %26 = vector.broadcast %cst_21 : f32 to vector<8x1xf32>
      %27 = arith.mulf %25, %26 : vector<8x1xf32>
      %28 = arith.mulf %23, %23 : vector<8x128xf32>
      %cst_22 = arith.constant dense<0.000000e+00> : vector<8xf32>
      %29 = vector.multi_reduction <add>, %28, %cst_22 [1] : vector<8x128xf32> to vector<8xf32>
      %30 = vector.shape_cast %29 : vector<8xf32> to vector<8x1xf32>
      %cst_23 = arith.constant 3.125000e-02 : f32
      %31 = vector.broadcast %cst_23 : f32 to vector<8x1xf32>
      %32 = arith.mulf %30, %31 : vector<8x1xf32>
      %33 = arith.mulf %27, %27 : vector<8x1xf32>
      %34 = arith.subf %32, %33 : vector<8x1xf32>
      %cst_24 = arith.constant 0.000000e+00 : f32
      %35 = vector.broadcast %cst_24 : f32 to vector<8x1xf32>
      %36 = arith.maximumf %34, %35 : vector<8x1xf32>
      %37 = vector.broadcast %27 : vector<8x1xf32> to vector<8x128xf32>
      %38 = arith.subf %23, %37 : vector<8x128xf32>
      %cst_25 = arith.constant 9.99999974E-6 : f32
      %39 = vector.broadcast %cst_25 : f32 to vector<8x1xf32>
      %40 = arith.addf %36, %39 : vector<8x1xf32>
      %41 = math.rsqrt %40 : vector<8x1xf32>
      %42 = vector.broadcast %41 : vector<8x1xf32> to vector<8x128xf32>
      %43 = arith.mulf %38, %42 : vector<8x128xf32>
      %c1 = arith.constant 1 : index
      %c0_26 = arith.constant 0 : index
      %44 = vector.load %arg6[%c1, %c0_26] : memref<3x128xf32, #tpu.memory_space<vmem>>, vector<1x128xf32>
      %45 = vector.broadcast %44 : vector<1x128xf32> to vector<8x128xf32>
      %46 = arith.mulf %43, %45 : vector<8x128xf32>
      %c2 = arith.constant 2 : index
      %c0_27 = arith.constant 0 : index
      %47 = vector.load %arg6[%c2, %c0_27] : memref<3x128xf32, #tpu.memory_space<vmem>>, vector<1x128xf32>
      %48 = vector.broadcast %47 : vector<1x128xf32> to vector<8x128xf32>
      %49 = arith.addf %46, %48 : vector<8x128xf32>
      %c0_28 = arith.constant 0 : index
      %c0_29 = arith.constant 0 : index
      %50 = vector.load %arg7[%c0_28, %c0_29] : memref<8x128xf32, #tpu.memory_space<vmem>>, vector<8x128xf32>
      tpu.vector_store %arg7[%c0_28, %c0_29], %49 {strides = array<i32>} : memref<8x128xf32, #tpu.memory_space<vmem>>, vector<8x128xf32>,
    } else {
    }
    return
  }
  func.func @transform_0(%arg0: i32, %arg1: i32) -> (i32, i32) {
    %c0_i32 = arith.constant 0 : i32
    %c0_i32_0 = arith.constant 0 : i32
    return %arg0, %c0_i32 : i32, i32
  }
  func.func @transform_1(%arg0: i32, %arg1: i32) -> (i32, i32) {
    %c0_i32 = arith.constant 0 : i32
    %c0_i32_0 = arith.constant 0 : i32
    %c0_i32_1 = arith.constant 0 : i32
    return %c0_i32, %c0_i32_0 : i32, i32
  }
  func.func @transform_2(%arg0: i32, %arg1: i32) -> (i32, i32) {
    %c0_i32 = arith.constant 0 : i32
    %c0_i32_0 = arith.constant 0 : i32
    %c0_i32_1 = arith.constant 0 : i32
    return %c0_i32, %c0_i32_0 : i32, i32
  }
  func.func @transform_3(%arg0: i32, %arg1: i32) -> (i32, i32) {
    %c0_i32 = arith.constant 0 : i32
    %c0_i32_0 = arith.constant 0 : i32
    %c0_i32_1 = arith.constant 0 : i32
    return %c0_i32, %c0_i32_0 : i32, i32
  }
  func.func @transform_4(%arg0: i32, %arg1: i32) -> (i32, i32) {
    %c0_i32 = arith.constant 0 : i32
    %c0_i32_0 = arith.constant 0 : i32
    %c0_i32_1 = arith.constant 0 : i32
    return %c0_i32, %c0_i32_0 : i32, i32
  }
  func.func @transform_5(%arg0: i32, %arg1: i32) -> (i32, i32) {
    %c0_i32 = arith.constant 0 : i32
    %c0_i32_0 = arith.constant 0 : i32
    return %arg0, %c0_i32 : i32, i32
  }
}

</mosaic_0001>

<llo_original>
// kernel: tpu_custom_call.1
$region0: #{tpu_custom_call.1}
  #allocation0 [shape = 'u32[]', space=smem, size = 0x4, offset = 0x4, fixed_abs, tag = 'smem constant byte address 0x4 - core index']
  #allocation1 [shape = 'u32[144,128]{1,0:T(1,128)}', space=vmem, size = 0x12000, scoped, tag = 'internal scratch']
  #allocation2 [shape = 'f32[8,128]{1,0:T(8,128)}', space=vmem, size = 0x1000, scoped, tag = 'scratch operand']
  %s0 = inlined_call_operand.hbm [shape: f32[16,128], index: 0, kind: input, shape index: {}]
  %s1 = inlined_call_operand.hbm [shape: f32[128,128], index: 1, kind: input, shape index: {}]
  %s2 = inlined_call_operand.vmem [shape: f32[1,128], index: 2, kind: input, shape index: {}]
  %s3 = inlined_call_operand.hbm [shape: f32[128,128], index: 3, kind: input, shape index: {}]
  %s4 = inlined_call_operand.vmem [shape: f32[3,128], index: 4, kind: input, shape index: {}]
  %s5 = inlined_call_operand.hbm [shape: f32[16,128], index: 5, kind: output, shape index: {}]
  %s6 = sld [smem:[#allocation0]]
  $region73: #{tpu_custom_call.1} parent=0
    _
  %s8 = ssub.s32 1, %s6
  %s9 = scalar_select 0, %s8, %s6
  $region1: #{tpu_custom_call.1} parent=0
    #allocation3 [shape = 'u8[8192]{0}', space=vmem, size = 0x2000, scoped, tag = 'input window, operand 0']
    #allocation4 [shape = 's32[2]{0}', space=sflag, size = 0x8, scoped, tag = 'scoped memory for tpu_custom_call.1']
    #allocation5 [shape = 's32[2]{0}', space=sflag, size = 0x8, scoped, tag = 'scoped memory for tpu_custom_call.1']
    #allocation6 [shape = 'u8[65536]{0}', space=vmem, size = 0x10000, scoped, tag = 'input window, operand 1, single buffered']
    #allocation7 [shape = 's32[1]{0}', space=sflag, size = 0x4, scoped, tag = 'scoped memory for tpu_custom_call.1']
    #allocation8 [shape = 'u8[65536]{0}', space=vmem, size = 0x10000, scoped, tag = 'input window, operand 3, single buffered']
    #allocation9 [shape = 'u8[8192]{0}', space=vmem, size = 0x2000, scoped, tag = 'output window, operand 0']
    %10 = vsyncpa [#allocation4], 0
    %s11 = scalar_lea.sflag [#allocation4], 1
    %12 = vsyncpa %s11, 0
    %13 = vsyncpa [#allocation7], 0
    %14 = vsyncpa [#allocation5], 0
    %s15 = scalar_lea.sflag [#allocation5], 1
    %16 = vsyncpa %s15, 0
    loop: start=0, step=1, limit=4
    $region2: #{tpu_custom_call.1} parent=1 // loop_pre_header
      _
    $region3: #{tpu_custom_call.1} parent=1 // loop_header
      %s18 = sphi 0, %s22
      %p19 = scmp.ge.s32.totalorder %s18, 4
      %s25 = sphi 0, %s37
      %s26 = sphi 0, %s33
      %s27 = sphi 0, %s25
      %s28 = sphi 0, %s26
      %s29 = sphi 0, %s27
      %s30 = sphi 0, %s28
      %s40 = sphi 0, %s42
      %s43 = sphi 0, %s40
      %s44 = sphi 0, %s43
      %s60 = sphi 0, %s44
      %s64 = sphi 0, %s64
      %s66 = sphi 0, %s64
      %s67 = sphi 0, %s66
      %s81 = sphi 0, %s67
      %s85 = sphi 0, %s85
      %s87 = sphi 0, %s85
      %s88 = sphi 0, %s87
      %s102 = sphi 0, %s88
      %s106 = sphi 0, %s106
      %s108 = sphi 0, %s106
      %s109 = sphi 0, %s108
      %s123 = sphi 0, %s109
      %s127 = sphi 0, %s127
      %s129 = sphi 0, %s127
      %s130 = sphi 0, %s129
      %s144 = sphi 0, %s130
      %s150 = sphi 0, %s152
      %s153 = sphi 0, %s150
      %s154 = sphi 0, %s153
      %s170 = sphi 0, %s154
    $region4: #{tpu_custom_call.1} parent=1 // loop_header_branch
      %21 = sbr.rel (%p19) target = $region8
    $region5: #{tpu_custom_call.1} parent=1 // loop_body
      %s23 = ssub.s32 %s18, 1
      %s24 = ssub.s32 %s18, 2
      %s31 = sadd.s32 1, %s26
      %p32 = scmp.ge.s32.totalorder %s31, 1
      %s33 = scalar_select %p32, 0, %s31
      %s34 = sadd.s32 1, %s25
      %s35 = scalar_select %p32, %s34, %s25
      %p36 = scmp.ge.s32.totalorder %s35, 2
      %s37 = scalar_select %p36, 0, %s35
      %s38 = ssub.s32 %s25, %s37
      %p39 = scmp.eq.s32.totalorder %s38, 0
      %s41 = sadd.s32 %s40, 1
      %s42 = scalar_select %p39, %s40, %s41
      %p45 = pneg %p39
      %p46 = scmp.eq.s32.totalorder %s18, 1
      %p47 = por %p45, %p46
      %p48 = scmp.ne.s32.totalorder %s40, %s43
      %p49 = scmp.eq.s32.totalorder %s18, 0
      %p50 = por %p48, %p49
      %p51 = scmp.ne.s32.totalorder %s40, %s43
      %p52 = scmp.eq.s32.totalorder %s23, 1
      %p53 = por %p51, %p52
      %p54 = scmp.ne.s32.totalorder %s43, %s44
      %p55 = scmp.eq.s32.totalorder %s23, 0
      %p56 = por %p54, %p55
      %p57 = scmp.ne.s32.totalorder %s43, %s44
      %p58 = scmp.eq.s32.totalorder %s24, 1
      %p59 = por %p57, %p58
      %p61 = scmp.ne.s32.totalorder %s44, %s60
      %p62 = scmp.eq.s32.totalorder %s24, 0
      %p63 = por %p61, %p62
      %s65 = sadd.s32 %s64, 1
      %p68 = scmp.eq.s32.totalorder %s18, 1
      %p69 = scmp.ne.s32.totalorder %s64, %s66
      %p70 = scmp.eq.s32.totalorder %s18, 0
      %p71 = por %p69, %p70
      %p72 = scmp.ne.s32.totalorder %s64, %s66
      %p73 = scmp.eq.s32.totalorder %s23, 1
      %p74 = por %p72, %p73
      %p75 = scmp.ne.s32.totalorder %s66, %s67
      %p76 = scmp.eq.s32.totalorder %s23, 0
      %p77 = por %p75, %p76
      %p78 = scmp.ne.s32.totalorder %s66, %s67
      %p79 = scmp.eq.s32.totalorder %s24, 1
      %p80 = por %p78, %p79
      %p82 = scmp.ne.s32.totalorder %s67, %s81
      %p83 = scmp.eq.s32.totalorder %s24, 0
      %p84 = por %p82, %p83
      %s86 = sadd.s32 %s85, 1
      %p89 = scmp.eq.s32.totalorder %s18, 1
      %p90 = scmp.ne.s32.totalorder %s85, %s87
      %p91 = scmp.eq.s32.totalorder %s18, 0
      %p92 = por %p90, %p91
      %p93 = scmp.ne.s32.totalorder %s85, %s87
      %p94 = scmp.eq.s32.totalorder %s23, 1
      %p95 = por %p93, %p94
      %p96 = scmp.ne.s32.totalorder %s87, %s88
      %p97 = scmp.eq.s32.totalorder %s23, 0
      %p98 = por %p96, %p97
      %p99 = scmp.ne.s32.totalorder %s87, %s88
      %p100 = scmp.eq.s32.totalorder %s24, 1
      %p101 = por %p99, %p100
      %p103 = scmp.ne.s32.totalorder %s88, %s102
      %p104 = scmp.eq.s32.totalorder %s24, 0
      %p105 = por %p103, %p104
      %s107 = sadd.s32 %s106, 1
      %p110 = scmp.eq.s32.totalorder %s18, 1
      %p111 = scmp.ne.s32.totalorder %s106, %s108
      %p112 = scmp.eq.s32.totalorder %s18, 0
      %p113 = por %p111, %p112
      %p114 = scmp.ne.s32.totalorder %s106, %s108
      %p115 = scmp.eq.s32.totalorder %s23, 1
      %p116 = por %p114, %p115
      %p117 = scmp.ne.s32.totalorder %s108, %s109
      %p118 = scmp.eq.s32.totalorder %s23, 0
      %p119 = por %p117, %p118
      %p120 = scmp.ne.s32.totalorder %s108, %s109
      %p121 = scmp.eq.s32.totalorder %s24, 1
      %p122 = por %p120, %p121
      %p124 = scmp.ne.s32.totalorder %s109, %s123
      %p125 = scmp.eq.s32.totalorder %s24, 0
      %p126 = por %p124, %p125
      %s128 = sadd.s32 %s127, 1
      %p131 = scmp.eq.s32.totalorder %s18, 1
      %p132 = scmp.ne.s32.totalorder %s127, %s129
      %p133 = scmp.eq.s32.totalorder %s18, 0
      %p134 = por %p132, %p133
      %p135 = scmp.ne.s32.totalorder %s127, %s129
      %p136 = scmp.eq.s32.totalorder %s23, 1
      %p137 = por %p135, %p136
      %p138 = scmp.ne.s32.totalorder %s129, %s130
      %p139 = scmp.eq.s32.totalorder %s23, 0
      %p140 = por %p138, %p139
      %p141 = scmp.ne.s32.totalorder %s129, %s130
      %p142 = scmp.eq.s32.totalorder %s24, 1
      %p143 = por %p141, %p142
      %p145 = scmp.ne.s32.totalorder %s130, %s144
      %p146 = scmp.eq.s32.totalorder %s24, 0
      %p147 = por %p145, %p146
      %s148 = ssub.s32 %s25, %s37
      %p149 = scmp.eq.s32.totalorder %s148, 0
      %s151 = sadd.s32 %s150, 1
      %s152 = scalar_select %p149, %s150, %s151
      %p155 = pneg %p149
      %p156 = scmp.eq.s32.totalorder %s18, 1
      %p157 = por %p155, %p156
      %p158 = scmp.ne.s32.totalorder %s150, %s153
      %p159 = scmp.eq.s32.totalorder %s18, 0
      %p160 = por %p158, %p159
      %p161 = scmp.ne.s32.totalorder %s150, %s153
      %p162 = scmp.eq.s32.totalorder %s23, 1
      %p163 = por %p161, %p162
      %p164 = scmp.ne.s32.totalorder %s153, %s154
      %p165 = scmp.eq.s32.totalorder %s23, 0
      %p166 = por %p164, %p165
      %p167 = scmp.ne.s32.totalorder %s153, %s154
      %p168 = scmp.eq.s32.totalorder %s24, 1
      %p169 = por %p167, %p168
      %p171 = scmp.ne.s32.totalorder %s154, %s170
      %p172 = scmp.eq.s32.totalorder %s24, 0
      %p173 = por %p171, %p172
      %p174 = scmp.le.s32.totalorder 1, %s18
      %p175 = scmp.lt.s32.totalorder %s18, 3
      %p176 = pnand %p174, %p175
      %p177 = pneg %p176
      // Predicated region
      $region9: #{tpu_custom_call.1} parent=5 // pred_check
        _
      $region10: #{tpu_custom_call.1} parent=5 // pred_check_branch
        %179 = sbr.rel (%p176) target = $region12
      $region11: #{tpu_custom_call.1} parent=5 // pred_region
        %s180 = ssub.s32 %s18, 1
        // Predicated region
        $region13: #{tpu_custom_call.1} parent=11 // pred_check
          %p181 = pneg %p77
        $region14: #{tpu_custom_call.1} parent=11 // pred_check_branch
          %183 = sbr.rel (%p181) target = $region16
        $region15: #{tpu_custom_call.1} parent=11 // pred_region
          %s185 = ssub.s32 2048, 2048
          %186 = vsyncadd [#allocation7], %s185
          %s187 = sshll.u32 [#allocation6], 4
          %s188 = int_to_ptr.vmem [resolvable:$true] %s187
          %193 = dma.hbm_to_vmem [thread:$0]  %s1, 2048, %s188, [#allocation7], 128, 128, 8
        $region16: #{tpu_custom_call.1} parent=11 // pred_fallthru
          _
        // Predicated region
        $region17: #{tpu_custom_call.1} parent=11 // pred_check
          %p194 = pneg %p98
        $region18: #{tpu_custom_call.1} parent=11 // pred_check_branch
          %196 = sbr.rel (%p194) target = $region20
        $region19: #{tpu_custom_call.1} parent=11 // pred_region
          _
        $region20: #{tpu_custom_call.1} parent=11 // pred_fallthru
          _
        // Predicated region
        $region21: #{tpu_custom_call.1} parent=11 // pred_check
          %p197 = pneg %p119
        $region22: #{tpu_custom_call.1} parent=11 // pred_check_branch
          %199 = sbr.rel (%p197) target = $region24
        $region23: #{tpu_custom_call.1} parent=11 // pred_region
          %s201 = ssub.s32 2048, 2048
          %202 = vsyncadd [#allocation7], %s201
          %s203 = sshll.u32 [#allocation8], 4
          %s204 = int_to_ptr.vmem [resolvable:$true] %s203
          %209 = dma.hbm_to_vmem [thread:$0]  %s3, 2048, %s204, [#allocation7], 128, 128, 8
        $region24: #{tpu_custom_call.1} parent=11 // pred_fallthru
          _
        // Predicated region
        $region25: #{tpu_custom_call.1} parent=11 // pred_check
          %p210 = pneg %p140
        $region26: #{tpu_custom_call.1} parent=11 // pred_check_branch
          %212 = sbr.rel (%p210) target = $region28
        $region27: #{tpu_custom_call.1} parent=11 // pred_region
          _
        $region28: #{tpu_custom_call.1} parent=11 // pred_fallthru
          _
      $region12: #{tpu_custom_call.1} parent=5 // pred_fallthru
        _
      %p213 = scmp.lt.s32.totalorder %s18, 2
      // Predicated region
      $region29: #{tpu_custom_call.1} parent=5 // pred_check
        %p214 = pneg %p213
      $region30: #{tpu_custom_call.1} parent=5 // pred_check_branch
        %216 = sbr.rel (%p214) target = $region32
      $region31: #{tpu_custom_call.1} parent=5 // pred_region
        // Predicated region
        $region33: #{tpu_custom_call.1} parent=31 // pred_check
          %p217 = pneg %p50
        $region34: #{tpu_custom_call.1} parent=31 // pred_check_branch
          %219 = sbr.rel (%p217) target = $region36
        $region35: #{tpu_custom_call.1} parent=31 // pred_region
          %s220 = sand.u32 %s40, 1
          %s221 = scalar_lea.sflag [#allocation4], %s220
          %s222 = sand.u32 %s40, 1
          %s223 = smul.addr %s222, 8
          %s224 = scalar_lea.vmem [#allocation3], %s223
          %s226 = ssub.s32 128, 128
          %227 = vsyncadd %s221, %s226
          %s228 = smul.addr %s25, 128
          %s229 = scalar_lea.hbm %s0, %s228
          %s231 = sshll.u32 %s224, 4
          %s232 = int_to_ptr.vmem [resolvable:$true] %s231
          %234 = dma.hbm_to_vmem [thread:$0]  %s229, 128, %s232, %s221
        $region36: #{tpu_custom_call.1} parent=31 // pred_fallthru
          _
      $region32: #{tpu_custom_call.1} parent=5 // pred_fallthru
        _
      %p235 = scmp.le.s32.totalorder 1, %s18
      %p236 = scmp.lt.s32.totalorder %s18, 3
      %p237 = pnand %p235, %p236
      %p238 = pneg %p237
      // Predicated region
      $region37: #{tpu_custom_call.1} parent=5 // pred_check
        _
      $region38: #{tpu_custom_call.1} parent=5 // pred_check_branch
        %240 = sbr.rel (%p237) target = $region40
      $region39: #{tpu_custom_call.1} parent=5 // pred_region
        %s241 = ssub.s32 %s18, 1
        %s242 = sand.u32 %s43, 1
        %s243 = scalar_lea.sflag [#allocation4], %s242
        %s244 = sand.u32 %s43, 1
        %s245 = smul.addr %s244, 8
        %s246 = scalar_lea.vmem [#allocation3], %s245
        // Predicated region
        $region41: #{tpu_custom_call.1} parent=39 // pred_check
          %p247 = pneg %p56
        $region42: #{tpu_custom_call.1} parent=39 // pred_check_branch
          %249 = sbr.rel (%p247) target = $region44
        $region43: #{tpu_custom_call.1} parent=39 // pred_region
          %250 = dma.done %s243, 128
        $region44: #{tpu_custom_call.1} parent=39 // pred_fallthru
          _
        // Predicated region
        $region45: #{tpu_custom_call.1} parent=39 // pred_check
          %p251 = pneg %p77
        $region46: #{tpu_custom_call.1} parent=39 // pred_check_branch
          %253 = sbr.rel (%p251) target = $region48
        $region47: #{tpu_custom_call.1} parent=39 // pred_region
          %254 = dma.done [#allocation7], 2048
        $region48: #{tpu_custom_call.1} parent=39 // pred_fallthru
          _
        // Predicated region
        $region49: #{tpu_custom_call.1} parent=39 // pred_check
          %p255 = pneg %p119
        $region50: #{tpu_custom_call.1} parent=39 // pred_check_branch
          %257 = sbr.rel (%p255) target = $region52
        $region51: #{tpu_custom_call.1} parent=39 // pred_region
          %258 = dma.done [#allocation7], 2048
        $region52: #{tpu_custom_call.1} parent=39 // pred_fallthru
          _
        %s259 = sand.u32 %s43, 1
        %s260 = scalar_lea.sflag [#allocation4], %s259
        %s261 = sand.u32 %s43, 1
        %s262 = smul.addr %s261, 8
        %s263 = scalar_lea.vmem [#allocation3], %s262
        %p264 = pneg %p56
        %p265 = pneg %p53
        %p266 = pneg %p77
        %p267 = pneg %p74
        %p268 = pneg %p98
        %p269 = pneg %p95
        %p270 = pneg %p119
        %p271 = pneg %p116
        %p272 = pneg %p140
        %p273 = pneg %p137
        %p274 = pneg %p166
        %p275 = pneg %p163
        %s276 = sand.u32 %s153, 1
        %s277 = scalar_lea.sflag [#allocation5], %s276
        %s278 = sand.u32 %s153, 1
        %s279 = smul.addr %s278, 8
        %s280 = scalar_lea.vmem [#allocation9], %s279
        %p281 = scmp.eq.s32.totalorder %s28, 0
        // Predicated region
        $region53: #{tpu_custom_call.1} parent=39 // pred_check
          %p282 = pneg %p281
        $region54: #{tpu_custom_call.1} parent=39 // pred_check_branch
          %284 = sbr.rel (%p282) target = $region56
        $region55: #{tpu_custom_call.1} parent=39 // pred_region
          %285 = vst [vmem:[#allocation2] sm:$0xff] 0.0
        $region56: #{tpu_custom_call.1} parent=39 // pred_fallthru
          _
        %v286 = vld [vmem:[%s246] sm:$0xff]
        %v287 = vld [vmem:[#allocation6] sm:$0xff]
        %v288 = vld [vmem:[#allocation6 + $0x8] sm:$0xff]
        %v289 = vld [vmem:[#allocation6 + $0x10] sm:$0xff]
        %v290 = vld [vmem:[#allocation6 + $0x18] sm:$0xff]
        %v291 = vld [vmem:[#allocation6 + $0x20] sm:$0xff]
        %v292 = vld [vmem:[#allocation6 + $0x28] sm:$0xff]
        %v293 = vld [vmem:[#allocation6 + $0x30] sm:$0xff]
        %v294 = vld [vmem:[#allocation6 + $0x38] sm:$0xff]
        %v295 = vld [vmem:[#allocation6 + $0x40] sm:$0xff]
        %v296 = vld [vmem:[#allocation6 + $0x48] sm:$0xff]
        %v297 = vld [vmem:[#allocation6 + $0x50] sm:$0xff]
        %v298 = vld [vmem:[#allocation6 + $0x58] sm:$0xff]
        %v299 = vld [vmem:[#allocation6 + $0x60] sm:$0xff]
        %v300 = vld [vmem:[#allocation6 + $0x68] sm:$0xff]
        %v301 = vld [vmem:[#allocation6 + $0x70] sm:$0xff]
        %v302 = vld [vmem:[#allocation6 + $0x78] sm:$0xff]
        %v303 = vld [vmem:[%s2] sm:$0x1]
        %v305 = vlaneseq
        %v306 = vshrl.u32 %v305, 7
        %v307 = vsub.s32 0, %v306
        %v308 = vrot.slane %v303, %v307
        %310 = vmatprep.subr.mxu0 0.0
        %311 = vmatpush1.msra.mxu0 %v287
        %312 = vmatprep.subr.mxu0 0.0
        %313 = vmatpush1.msra.mxu0 %v288
        %314 = vmatprep.subr.mxu0 0.0
        %315 = vmatpush1.msra.mxu0 %v289
        %316 = vmatprep.subr.mxu0 0.0
        %317 = vmatpush1.msra.mxu0 %v290
        %318 = vmatprep.subr.mxu0 0.0
        %319 = vmatpush1.msra.mxu0 %v291
        %320 = vmatprep.subr.mxu0 0.0
        %321 = vmatpush1.msra.mxu0 %v292
        %322 = vmatprep.subr.mxu0 0.0
        %323 = vmatpush1.msra.mxu0 %v293
        %324 = vmatprep.subr.mxu0 0.0
        %325 = vmatpush1.msra.mxu0 %v294
        %326 = vmatprep.subr.mxu0 0.0
        %327 = vmatpush1.msra.mxu0 %v295
        %328 = vmatprep.subr.mxu0 0.0
        %329 = vmatpush1.msra.mxu0 %v296
        %330 = vmatprep.subr.mxu0 0.0
        %331 = vmatpush1.msra.mxu0 %v297
        %332 = vmatprep.subr.mxu0 0.0
        %333 = vmatpush1.msra.mxu0 %v298
        %334 = vmatprep.subr.mxu0 0.0
        %335 = vmatpush1.msra.mxu0 %v299
        %336 = vmatprep.subr.mxu0 0.0
        %337 = vmatpush1.msra.mxu0 %v300
        %338 = vmatprep.subr.mxu0 0.0
        %339 = vmatpush1.msra.mxu0 %v301
        %340 = vmatprep.subr.mxu0 0.0
        %341 = vmatpush1.msra.mxu0 %v302
        %342 = vmatprep.subr.mxu0 0.0
        %343 = vmatpush1.msra.mxu0 0.0
        %344 = vmatprep.subr.mxu0 0.0
        %345 = vmatpush1.msra.mxu0 0.0
        %346 = vmatprep.subr.mxu0 0.0
        %347 = vmatpush1.msra.mxu0 0.0
        %348 = vmatprep.subr.mxu0 0.0
        %349 = vmatpush1.msra.mxu0 0.0
        %350 = vmatprep.subr.mxu0 0.0
        %351 = vmatpush1.msra.mxu0 0.0
        %352 = vmatprep.subr.mxu0 0.0
        %353 = vmatpush1.msra.mxu0 0.0
        %354 = vmatprep.subr.mxu0 0.0
        %355 = vmatpush1.msra.mxu0 0.0
        %356 = vmatprep.subr.mxu0 0.0
        %357 = vmatpush1.msra.mxu0 0.0
        %358 = vmatprep.subr.mxu0 0.0
        %359 = vmatpush1.msra.mxu0 0.0
        %360 = vmatprep.subr.mxu0 0.0
        %361 = vmatpush1.msra.mxu0 0.0
        %362 = vmatprep.subr.mxu0 0.0
        %363 = vmatpush1.msra.mxu0 0.0
        %364 = vmatprep.subr.mxu0 0.0
        %365 = vmatpush1.msra.mxu0 0.0
        %366 = vmatprep.subr.mxu0 0.0
        %367 = vmatpush1.msra.mxu0 0.0
        %368 = vmatprep.subr.mxu0 0.0
        %369 = vmatpush1.msra.mxu0 0.0
        %370 = vmatprep.subr.mxu0 0.0
        %371 = vmatpush1.msra.mxu0 0.0
        %372 = vmatprep.subr.mxu0 0.0
        %373 = vmatpush1.msra.mxu0 0.0
        %374 = vmatprep.mubr.f32.mxu0 0.0
        %375 = vmatmul.mubr.f32.gmra.mrb[0].mxu0 %v286
        %v376 = vpop.f32.mrb[0].mxu0
        %v377 = vadd.f32 %v308, %v376
        %v378 = vpop.f32.mrb[0].mxu0
        %379 = vdwg.mxu0
        %v380 = vmax.f32 %v377, 0.0
        %v381 = vld [vmem:[#allocation2] sm:$0xff]
        %v382 = vld [vmem:[#allocation8] sm:$0xff]
        %v383 = vld [vmem:[#allocation8 + $0x8] sm:$0xff]
        %v384 = vld [vmem:[#allocation8 + $0x10] sm:$0xff]
        %v385 = vld [vmem:[#allocation8 + $0x18] sm:$0xff]
        %v386 = vld [vmem:[#allocation8 + $0x20] sm:$0xff]
        %v387 = vld [vmem:[#allocation8 + $0x28] sm:$0xff]
        %v388 = vld [vmem:[#allocation8 + $0x30] sm:$0xff]
        %v389 = vld [vmem:[#allocation8 + $0x38] sm:$0xff]
        %v390 = vld [vmem:[#allocation8 + $0x40] sm:$0xff]
        %v391 = vld [vmem:[#allocation8 + $0x48] sm:$0xff]
        %v392 = vld [vmem:[#allocation8 + $0x50] sm:$0xff]
        %v393 = vld [vmem:[#allocation8 + $0x58] sm:$0xff]
        %v394 = vld [vmem:[#allocation8 + $0x60] sm:$0xff]
        %v395 = vld [vmem:[#allocation8 + $0x68] sm:$0xff]
        %v396 = vld [vmem:[#allocation8 + $0x70] sm:$0xff]
        %v397 = vld [vmem:[#allocation8 + $0x78] sm:$0xff]
        %398 = vmatprep.subr.mxu0 0.0
        %399 = vmatpush1.msra.mxu0 %v382
        %400 = vmatprep.subr.mxu0 0.0
        %401 = vmatpush1.msra.mxu0 %v383
        %402 = vmatprep.subr.mxu0 0.0
        %403 = vmatpush1.msra.mxu0 %v384
        %404 = vmatprep.subr.mxu0 0.0
        %405 = vmatpush1.msra.mxu0 %v385
        %406 = vmatprep.subr.mxu0 0.0
        %407 = vmatpush1.msra.mxu0 %v386
        %408 = vmatprep.subr.mxu0 0.0
        %409 = vmatpush1.msra.mxu0 %v387
        %410 = vmatprep.subr.mxu0 0.0
        %411 = vmatpush1.msra.mxu0 %v388
        %412 = vmatprep.subr.mxu0 0.0
        %413 = vmatpush1.msra.mxu0 %v389
        %414 = vmatprep.subr.mxu0 0.0
        %415 = vmatpush1.msra.mxu0 %v390
        %416 = vmatprep.subr.mxu0 0.0
        %417 = vmatpush1.msra.mxu0 %v391
        %418 = vmatprep.subr.mxu0 0.0
        %419 = vmatpush1.msra.mxu0 %v392
        %420 = vmatprep.subr.mxu0 0.0
        %421 = vmatpush1.msra.mxu0 %v393
        %422 = vmatprep.subr.mxu0 0.0
        %423 = vmatpush1.msra.mxu0 %v394
        %424 = vmatprep.subr.mxu0 0.0
        %425 = vmatpush1.msra.mxu0 %v395
        %426 = vmatprep.subr.mxu0 0.0
        %427 = vmatpush1.msra.mxu0 %v396
        %428 = vmatprep.subr.mxu0 0.0
        %429 = vmatpush1.msra.mxu0 %v397
        %430 = vmatprep.subr.mxu0 0.0
        %431 = vmatpush1.msra.mxu0 0.0
        %432 = vmatprep.subr.mxu0 0.0
        %433 = vmatpush1.msra.mxu0 0.0
        %434 = vmatprep.subr.mxu0 0.0
        %435 = vmatpush1.msra.mxu0 0.0
        %436 = vmatprep.subr.mxu0 0.0
        %437 = vmatpush1.msra.mxu0 0.0
        %438 = vmatprep.subr.mxu0 0.0
        %439 = vmatpush1.msra.mxu0 0.0
        %440 = vmatprep.subr.mxu0 0.0
        %441 = vmatpush1.msra.mxu0 0.0
        %442 = vmatprep.subr.mxu0 0.0
        %443 = vmatpush1.msra.mxu0 0.0
        %444 = vmatprep.subr.mxu0 0.0
        %445 = vmatpush1.msra.mxu0 0.0
        %446 = vmatprep.subr.mxu0 0.0
        %447 = vmatpush1.msra.mxu0 0.0
        %448 = vmatprep.subr.mxu0 0.0
        %449 = vmatpush1.msra.mxu0 0.0
        %450 = vmatprep.subr.mxu0 0.0
        %451 = vmatpush1.msra.mxu0 0.0
        %452 = vmatprep.subr.mxu0 0.0
        %453 = vmatpush1.msra.mxu0 0.0
        %454 = vmatprep.subr.mxu0 0.0
        %455 = vmatpush1.msra.mxu0 0.0
        %456 = vmatprep.subr.mxu0 0.0
        %457 = vmatpush1.msra.mxu0 0.0
        %458 = vmatprep.subr.mxu0 0.0
        %459 = vmatpush1.msra.mxu0 0.0
        %460 = vmatprep.subr.mxu0 0.0
        %461 = vmatpush1.msra.mxu0 0.0
        %462 = vmatprep.mubr.f32.mxu0 0.0
        %463 = vmatmul.mubr.f32.gmra.mrb[0].mxu0 %v380
        %v464 = vpop.f32.mrb[0].mxu0
        %v465 = vadd.f32 0.0, %v464
        %v466 = vpop.f32.mrb[0].mxu0
        %467 = vdwg.mxu0
        %v468 = vadd.f32 %v381, %v465
        %469 = vst [vmem:[#allocation2] sm:$0xff] %v468
        // Predicated region
        $region57: #{tpu_custom_call.1} parent=39 // pred_check
          %p470 = pneg %p281
        $region58: #{tpu_custom_call.1} parent=39 // pred_check_branch
          %472 = sbr.rel (%p470) target = $region60
        $region59: #{tpu_custom_call.1} parent=39 // pred_region
          %v473 = vld [vmem:[#allocation2] sm:$0xff]
          %v474 = vld [vmem:[%s4] sm:$0x1]
          %v475 = vlaneseq
          %v476 = vshrl.u32 %v475, 7
          %v477 = vsub.s32 0, %v476
          %v478 = vrot.slane %v474, %v477
          %v479 = vadd.f32 %v473, %v478
          %v480 = vadd.f32 %v479, %v286
          %481 = vadd.xlane.f32.xlu0 %v480
          %v482 = vpop.xlane.xlu0 %481
          %v483 = vmul.f32 %v482, 0.03125
          %v484 = vmul.f32 %v480, %v480
          %485 = vadd.xlane.f32.xlu0 %v484
          %v486 = vpop.xlane.xlu0 %485
          %v487 = vmul.f32 %v486, 0.03125
          %v488 = vmul.f32 %v483, %v483
          %v489 = vsub.f32 %v487, %v488
          %v490 = vmax.f32 %v489, 0.0
          %v491 = vsub.f32 %v480, %v483
          %v492 = vadd.f32 %v490, 1e-05
          %v493 = vrsqrt.pop %v492
          %v494 = vmul.f32 %v491, %v493
          %v495 = vld [vmem:[%s4 + $0x1] sm:$0x1]
          %v496 = vlaneseq
          %v497 = vshrl.u32 %v496, 7
          %v498 = vsub.s32 0, %v497
          %v499 = vrot.slane %v495, %v498
          %v500 = vmul.f32 %v494, %v499
          %v501 = vld [vmem:[%s4 + $0x2] sm:$0x1]
          %v502 = vlaneseq
          %v503 = vshrl.u32 %v502, 7
          %v504 = vsub.s32 0, %v503
          %v505 = vrot.slane %v501, %v504
          %v506 = vadd.f32 %v500, %v505
          %507 = vst [vmem:[%s280] sm:$0xff] %v506
        $region60: #{tpu_custom_call.1} parent=39 // pred_fallthru
          _
        %s508 = sand.u32 %s153, 1
        %s509 = scalar_lea.sflag [#allocation5], %s508
        %s510 = sand.u32 %s153, 1
        %s511 = smul.addr %s510, 8
        %s512 = scalar_lea.vmem [#allocation9], %s511
        // Predicated region
        $region61: #{tpu_custom_call.1} parent=39 // pred_check
          %p513 = pneg %p163
        $region62: #{tpu_custom_call.1} parent=39 // pred_check_branch
          %515 = sbr.rel (%p513) target = $region64
        $region63: #{tpu_custom_call.1} parent=39 // pred_region
          %s517 = ssub.s32 128, 128
          %518 = vsyncadd %s509, %s517
          %s519 = smul.addr %s27, 128
          %s520 = scalar_lea.hbm %s5, %s519
          %s522 = sshll.u32 %s512, 4
          %s523 = int_to_ptr.vmem [resolvable:$true] %s522
          %525 = dma.vmem_to_hbm [thread:$0]  %s523, 128, %s520, %s509
        $region64: #{tpu_custom_call.1} parent=39 // pred_fallthru
          _
      $region40: #{tpu_custom_call.1} parent=5 // pred_fallthru
        _
      %p526 = scmp.le.s32.totalorder 2, %s18
      // Predicated region
      $region65: #{tpu_custom_call.1} parent=5 // pred_check
        %p527 = pneg %p526
      $region66: #{tpu_custom_call.1} parent=5 // pred_check_branch
        %529 = sbr.rel (%p527) target = $region68
      $region67: #{tpu_custom_call.1} parent=5 // pred_region
        %s530 = ssub.s32 %s18, 2
        // Predicated region
        $region69: #{tpu_custom_call.1} parent=67 // pred_check
          %p531 = pneg %p169
        $region70: #{tpu_custom_call.1} parent=67 // pred_check_branch
          %533 = sbr.rel (%p531) target = $region72
        $region71: #{tpu_custom_call.1} parent=67 // pred_region
          %s534 = sand.u32 %s154, 1
          %s535 = scalar_lea.sflag [#allocation5], %s534
          %s536 = sand.u32 %s154, 1
          %s537 = smul.addr %s536, 8
          %s538 = scalar_lea.vmem [#allocation9], %s537
          %539 = dma.done %s535, 128
        $region72: #{tpu_custom_call.1} parent=67 // pred_fallthru
          _
      $region68: #{tpu_custom_call.1} parent=5 // pred_fallthru
        _
    $region6: #{tpu_custom_call.1} parent=1 // loop_footer
      %s22 = sadd.s32 1, %s18
    $region7: #{tpu_custom_call.1} parent=1 // loop_footer_branch
      %17 = sbr.rel target = $region3
    $region8: #{tpu_custom_call.1} parent=1 // loop_exit
      _
    %540 = vsyncpa [#allocation4], 1
    %s541 = scalar_lea.sflag [#allocation4], 1
    %542 = vsyncpa %s541, 1
    %543 = vsyncpa [#allocation7], 1
    %544 = vsyncpa [#allocation5], 1
    %s545 = scalar_lea.sflag [#allocation5], 1
    %546 = vsyncpa %s545, 1

</llo_original>
